<compile_context>
chip_gen: v6e
topology: v6e:2x2x1
jax: 0.10.0
libtpu: 0.0.40
codegen_flags: <defaults>
</compile_context>

<pallas_src>
import functools
import math

import jax
import jax.numpy as jnp
from jax.experimental import pallas as pl
from jax.experimental.pallas import tpu as pltpu

LOG_STD_MAX = 2.0
LOG_STD_MIN = -20.0
_LOG_CLAMP = math.log(1e-6)   # PyTorch: (1 - a^2).clamp(min=1e-6).log()
_HEAD_PAD = 128               # lane-aligned width of each head (mean / log_std)


def _round_up(x, m):
    return (x + m - 1) // m * m


def actor_kernel(state_ref, noise_ref,
                 w1_ref, b1_ref, w2_ref, b2_ref,
                 wh_ref, bh_ref,
                 out_ref,
                 *, max_action, action_dim):
    """One batch tile.  Writes a lane-dense (TB, 128) slab:
    lanes [0, A) = max_action * tanh(z), lane A = logp, remaining lanes = 0."""
    x = state_ref[...]            # (TB, S)   f32
    noise = noise_ref[...]        # (TB, 128) f32, zero in lanes >= action_dim

    # a = relu(l1(state)): bf16 operands on the MXU, f32 accumulate, then keep
    # the hidden activation only in bf16.
    a = jnp.maximum(
        jnp.dot(x.astype(jnp.bfloat16), w1_ref[...],
                preferred_element_type=jnp.float32) + b1_ref[...], 0.0
    ).astype(jnp.bfloat16)
    # a = relu(l2(a))
    a = jnp.maximum(
        jnp.dot(a, w2_ref[...],
                preferred_element_type=jnp.float32) + b2_ref[...], 0.0
    ).astype(jnp.bfloat16)

    # Fused mean / log_std heads; each head zero-padded to 128 lanes so the
    # split below is a vreg-aligned static slice (no XLU shuffle).
    heads = jnp.dot(a, wh_ref[...],
                    preferred_element_type=jnp.float32) + bh_ref[...]
    mu = heads[:, :_HEAD_PAD]
    log_std = jnp.clip(heads[:, _HEAD_PAD:], LOG_STD_MIN, LOG_STD_MAX)
    std = jnp.exp(log_std)

    # Reparameterized sample + tanh squash.  Padded lanes (>= action_dim):
    # mu = 0, noise = 0, log_std = clip(0) = 0 -> z = 0, action = 0, and every
    # logp term below is exactly 0, so the full-width lane reduction is exact.
    z = mu + noise * std
    action = jnp.tanh(z)

    # PyTorch parity: log((1 - tanh(z)^2).clamp(min=1e-6)), computed stably as
    #   max(2*(log2 - z - softplus(-2z)), log(1e-6))
    # softplus(t) = max(t, 0) + log(1 + exp(-|t|))   (f32 VPU/EUP ops)
    t = -2.0 * z
    softplus_t = jnp.maximum(t, 0.0) + jnp.log(1.0 + jnp.exp(-jnp.abs(t)))
    log1m_a2 = jnp.maximum(2.0 * (jnp.log(2.0) - z - softplus_t), _LOG_CLAMP)

    # Single fused cross-lane reduction for the log-prob.
    per_elem = -0.5 * noise * noise - log_std - log1m_a2
    logp = (jnp.sum(per_elem, axis=-1, keepdims=True)
            - 0.5 * jnp.log(2.0 * jnp.pi) * action_dim)

    # Pack the lane-dense output slab: lane A carries logp, lanes [0, A) carry
    # the scaled action (padded action lanes are exactly zero).
    lane = jax.lax.broadcasted_iota(jnp.int32, action.shape, 1)
    out_ref[...] = jnp.where(lane == action_dim, logp, max_action * action)


def actor_forward(state, noise, params, max_action, tile_b=2048):
    B, S = state.shape
    A = noise.shape[1]
    H = params["w1"].shape[1]
    assert A < _HEAD_PAD, "action_dim (+ logp lane) must fit in 128 lanes"

    state = state.astype(jnp.float32)

    # --- batch tile selection -------------------------------------------
    # Per-tile compute is tiny while each grid step costs ~0.35 us of pipeline
    # overhead, so pick the biggest tile the batch allows.  VMEM is a
    # non-issue on all generations at tile_b=2048 (weights are ~KiBs of bf16,
    # streamed/temporary activations a few MiB, far under the 32 MiB scoped
    # default and v7x's 64 MiB physical).
    tile_b = max(8, min(_round_up(tile_b, 8), _round_up(B, 8)))
    # >= 2 tiles when B > 8 so the "parallel" batch axis can shard across the
    # two v7x TensorCores (harmless no-op on single-TC v5e / v6e).
    if B > 8:
        tile_b = min(tile_b, _round_up(pl.cdiv(B, 2), 8))
    # Prefer a tile that divides B exactly: avoids a host-side HBM round trip
    # padding the state rows before the kernel.
    if B % tile_b != 0 and B % 8 == 0:
        divisors = [d for d in range(8, tile_b + 1, 8) if B % d == 0]
        if divisors:
            tile_b = divisors[-1]
    b_pad = _round_up(B, tile_b)
    if b_pad != B:
        state = jnp.pad(state, ((0, b_pad - B), (0, 0)))

    # Lane-pad the (tiny) noise to the 128-lane head width; zero padded lanes
    # make the padded logp terms exactly zero inside the kernel.
    noise_p = (jnp.zeros((b_pad, _HEAD_PAD), jnp.float32)
               .at[:B, :A].set(noise.astype(jnp.float32)))

    # bf16 weights for the MXU; f32 biases (added in f32).  Heads are
    # zero-padded: mean in lanes [0,128), log_std in lanes [128,256).
    w1 = params["w1"].astype(jnp.bfloat16)
    w2 = params["w2"].astype(jnp.bfloat16)
    b1 = params["b1"].astype(jnp.float32)
    b2 = params["b2"].astype(jnp.float32)
    wh = (jnp.zeros((H, 2 * _HEAD_PAD), jnp.float32)
          .at[:, :A].set(params["wm"])
          .at[:, _HEAD_PAD:_HEAD_PAD + A].set(params["ws"])
          ).astype(jnp.bfloat16)
    bh = (jnp.zeros((1, 2 * _HEAD_PAD), jnp.float32)
          .at[:, :A].set(params["bm"])
          .at[:, _HEAD_PAD:_HEAD_PAD + A].set(params["bs"]))

    grid = (b_pad // tile_b,)

    # Batch-streamed arrays follow the grid index; weights / biases use a
    # constant index_map so they are DMA'd once and stay VMEM-resident.
    in_specs = [
        pl.BlockSpec((tile_b, S), lambda i: (i, 0)),           # state
        pl.BlockSpec((tile_b, _HEAD_PAD), lambda i: (i, 0)),   # noise (padded)
        pl.BlockSpec((S, H), lambda i: (0, 0)),                # w1
        pl.BlockSpec((1, H), lambda i: (0, 0)),                # b1
        pl.BlockSpec((H, H), lambda i: (0, 0)),                # w2
        pl.BlockSpec((1, H), lambda i: (0, 0)),                # b2
        pl.BlockSpec((H, 2 * _HEAD_PAD), lambda i: (0, 0)),    # fused head W
        pl.BlockSpec((1, 2 * _HEAD_PAD), lambda i: (0, 0)),    # fused head b
    ]
    out_specs = pl.BlockSpec((tile_b, _HEAD_PAD), lambda i: (i, 0))

    flops = 2 * b_pad * (S * H + H * H + H * 2 * _HEAD_PAD)
    transcendentals = 5 * b_pad * _HEAD_PAD           # exp, tanh, exp, log, ...
    bytes_accessed = (4 * (state.size + noise_p.size + b_pad * _HEAD_PAD)
                      + 2 * (w1.size + w2.size + wh.size)
                      + 4 * (b1.size + b2.size + bh.size))

    out = pl.pallas_call(
        functools.partial(actor_kernel,
                          max_action=float(max_action), action_dim=A),
        out_shape=jax.ShapeDtypeStruct((b_pad, _HEAD_PAD), jnp.float32),
        grid=grid,
        in_specs=in_specs,
        out_specs=out_specs,
        compiler_params=pltpu.CompilerParams(
            dimension_semantics=("parallel",)),
        cost_estimate=pl.CostEstimate(
            flops=flops, transcendentals=transcendentals,
            bytes_accessed=bytes_accessed),
    )(state, noise_p, w1, b1, w2, b2, wh, bh)

    # Slice the packed slab: action in lanes [0, A), logp in lane A.
    return out[:B, :A], out[:B, A]


def init_actor_params(key, state_dim, action_dim, hidden_dim=256):
    """Mirrors weight_init: orthogonal weights, zero bias.
    Weights stored pre-transposed as (in, out)."""
    k1, k2, k3, k4 = jax.random.split(key, 4)
    ortho = jax.nn.initializers.orthogonal()
    # torch weight shape is (out, in); init there then transpose to (in, out)
    w1 = ortho(k1, (hidden_dim, state_dim), jnp.float32).T
    w2 = ortho(k2, (hidden_dim, hidden_dim), jnp.float32).T
    wm = ortho(k3, (action_dim, hidden_dim), jnp.float32).T
    ws = ortho(k4, (action_dim, hidden_dim), jnp.float32).T
    return {
        "w1": w1, "b1": jnp.zeros((1, hidden_dim), jnp.float32),
        "w2": w2, "b2": jnp.zeros((1, hidden_dim), jnp.float32),
        "wm": wm, "bm": jnp.zeros((1, action_dim), jnp.float32),
        "ws": ws, "bs": jnp.zeros((1, action_dim), jnp.float32),
    }


def actor_reference(state, noise, params, max_action):
    """Pure-JAX reference (PyTorch semantics).  Uses the same bf16 matmul
    operand quantization as the kernel and the identical (exact-math
    equivalent) stable form of log((1 - tanh(z)^2).clamp(min=1e-6)) so the
    comparison is apples-to-apples."""
    def mm(x, w):
        return jnp.dot(x.astype(jnp.bfloat16), w.astype(jnp.bfloat16),
                       preferred_element_type=jnp.float32)

    a = jax.nn.relu(mm(state, params["w1"]) + params["b1"])
    a = jax.nn.relu(mm(a, params["w2"]) + params["b2"])
    mu = mm(a, params["wm"]) + params["bm"]
    log_std = jnp.clip(mm(a, params["ws"]) + params["bs"],
                       LOG_STD_MIN, LOG_STD_MAX)
    std = jnp.exp(log_std)
    z = mu + noise * std
    action = jnp.tanh(z)
    t = -2.0 * z
    softplus_t = jnp.maximum(t, 0.0) + jnp.log(1.0 + jnp.exp(-jnp.abs(t)))
    log1m_a2 = jnp.maximum(2.0 * (jnp.log(2.0) - z - softplus_t), _LOG_CLAMP)
    residual = (jnp.sum(-0.5 * noise ** 2 - log_std, axis=-1)
                - 0.5 * jnp.log(2.0 * jnp.pi) * noise.shape[-1])
    logp = residual - jnp.sum(log1m_a2, axis=-1)
    return max_action * action, logp


def _check(batch, state_dim, action_dim, hidden_dim, max_action, tile_b, seed):
    key = jax.random.PRNGKey(seed)
    k_params, k_state, k_noise = jax.random.split(key, 3)
    params = init_actor_params(k_params, state_dim, action_dim, hidden_dim)
    state = jax.random.normal(k_state, (batch, state_dim), jnp.float32)
    noise = jax.random.normal(k_noise, (batch, action_dim), jnp.float32)

    action, logp = actor_forward(state, noise, params, max_action,
                                 tile_b=tile_b)
    jax.block_until_ready((action, logp))

    ref_action, ref_logp = actor_reference(state, noise, params, max_action)
    assert action.shape == (batch, action_dim) and logp.shape == (batch,)
    assert jnp.allclose(action, ref_action, atol=1e-4, rtol=1e-4), \
        float(jnp.max(jnp.abs(action - ref_action)))
    assert jnp.allclose(logp, ref_logp, atol=1e-3, rtol=1e-3), \
        float(jnp.max(jnp.abs(logp - ref_logp)))


if __name__ == "__main__":
    # Small, module-consistent shapes (batch=2, state_dim=16, action_dim=4,
    # hidden=32); single grid step (batch padded to the 8-sublane minimum).
    _check(batch=2, state_dim=16, action_dim=4, hidden_dim=32,
           max_action=1.0, tile_b=2048, seed=0)
    # Multi-tile pipelined path: the >=2-tile floor picks tile_b=24 -> 2 tiles
    # with no host-side row padding (24 divides 48).
    _check(batch=48, state_dim=16, action_dim=4, hidden_dim=32,
           max_action=1.0, tile_b=2048, seed=0)
    print("KERNEL_OK")
</pallas_src>

<mosaic_0001>
module attributes {stable_mosaic.version = 11 : i64} {
  func.func @actor_kernel(%arg0: i32, %arg1: memref<8x16xf32, #tpu.memory_space<vmem>>, %arg2: memref<8x128xf32, #tpu.memory_space<vmem>>, %arg3: memref<16x32xbf16, #tpu.memory_space<vmem>>, %arg4: memref<1x32xf32, #tpu.memory_space<vmem>>, %arg5: memref<32x32xbf16, #tpu.memory_space<vmem>>, %arg6: memref<1x32xf32, #tpu.memory_space<vmem>>, %arg7: memref<32x256xbf16, #tpu.memory_space<vmem>>, %arg8: memref<1x256xf32, #tpu.memory_space<vmem>>, %arg9: memref<8x128xf32, #tpu.memory_space<vmem>>) attributes {dimension_semantics = [#tpu.dimension_semantics<parallel>], iteration_bounds = array<i64: 1>, scalar_prefetch = 0 : i64, scratch_operands = 0 : i64, tpu.core_type = #tpu.core_type<tc>, window_params = [{transform_indices = @transform_0, window_bounds = array<i64: 8, 16>}, {transform_indices = @transform_1, window_bounds = array<i64: 8, 128>}, {pipeline_mode = #tpu.pipeline_mode<synchronous>, transform_indices = @transform_2, window_bounds = array<i64: 16, 32>}, {pipeline_mode = #tpu.pipeline_mode<synchronous>, transform_indices = @transform_3, window_bounds = array<i64: 1, 32>}, {pipeline_mode = #tpu.pipeline_mode<synchronous>, transform_indices = @transform_4, window_bounds = array<i64: 32, 32>}, {pipeline_mode = #tpu.pipeline_mode<synchronous>, transform_indices = @transform_5, window_bounds = array<i64: 1, 32>}, {pipeline_mode = #tpu.pipeline_mode<synchronous>, transform_indices = @transform_6, window_bounds = array<i64: 32, 256>}, {pipeline_mode = #tpu.pipeline_mode<synchronous>, transform_indices = @transform_7, window_bounds = array<i64: 1, 256>}, {transform_indices = @transform_8, window_bounds = array<i64: 8, 128>}]} {
    %c0 = arith.constant 0 : index
    %c0_0 = arith.constant 0 : index
    %0 = vector.load %arg1[%c0, %c0_0] : memref<8x16xf32, #tpu.memory_space<vmem>>, vector<8x16xf32>
    %c0_1 = arith.constant 0 : index
    %c0_2 = arith.constant 0 : index
    %1 = vector.load %arg2[%c0_1, %c0_2] : memref<8x128xf32, #tpu.memory_space<vmem>>, vector<8x128xf32>
    %2 = arith.truncf %0 : vector<8x16xf32> to vector<8x16xbf16>
    %c0_3 = arith.constant 0 : index
    %c0_4 = arith.constant 0 : index
    %3 = vector.load %arg3[%c0_3, %c0_4] : memref<16x32xbf16, #tpu.memory_space<vmem>>, vector<16x32xbf16>
    %cst = arith.constant dense<0.000000e+00> : vector<8x32xf32>
    %4 = tpu.matmul %2, %3, %cst {dimension_numbers = #tpu.dot_dimension_numbers<[1], [0], [0], [1], [0, 0, 1, 1], [], []>} : vector<8x16xbf16>, vector<16x32xbf16>, vector<8x32xf32> -> vector<8x32xf32>
    %c0_5 = arith.constant 0 : index
    %c0_6 = arith.constant 0 : index
    %5 = vector.load %arg4[%c0_5, %c0_6] : memref<1x32xf32, #tpu.memory_space<vmem>>, vector<1x32xf32>
    %6 = vector.broadcast %5 : vector<1x32xf32> to vector<8x32xf32>
    %7 = arith.addf %4, %6 : vector<8x32xf32>
    %cst_7 = arith.constant 0.000000e+00 : f32
    %8 = vector.broadcast %cst_7 : f32 to vector<8x32xf32>
    %9 = arith.maximumf %7, %8 : vector<8x32xf32>
    %10 = arith.truncf %9 : vector<8x32xf32> to vector<8x32xbf16>
    %c0_8 = arith.constant 0 : index
    %c0_9 = arith.constant 0 : index
    %11 = vector.load %arg5[%c0_8, %c0_9] : memref<32x32xbf16, #tpu.memory_space<vmem>>, vector<32x32xbf16>
    %cst_10 = arith.constant dense<0.000000e+00> : vector<8x32xf32>
    %12 = tpu.matmul %10, %11, %cst_10 {dimension_numbers = #tpu.dot_dimension_numbers<[1], [0], [0], [1], [0, 0, 1, 1], [], []>} : vector<8x32xbf16>, vector<32x32xbf16>, vector<8x32xf32> -> vector<8x32xf32>
    %c0_11 = arith.constant 0 : index
    %c0_12 = arith.constant 0 : index
    %13 = vector.load %arg6[%c0_11, %c0_12] : memref<1x32xf32, #tpu.memory_space<vmem>>, vector<1x32xf32>
    %14 = vector.broadcast %13 : vector<1x32xf32> to vector<8x32xf32>
    %15 = arith.addf %12, %14 : vector<8x32xf32>
    %cst_13 = arith.constant 0.000000e+00 : f32
    %16 = vector.broadcast %cst_13 : f32 to vector<8x32xf32>
    %17 = arith.maximumf %15, %16 : vector<8x32xf32>
    %18 = arith.truncf %17 : vector<8x32xf32> to vector<8x32xbf16>
    %c0_14 = arith.constant 0 : index
    %c0_15 = arith.constant 0 : index
    %19 = vector.load %arg7[%c0_14, %c0_15] : memref<32x256xbf16, #tpu.memory_space<vmem>>, vector<32x256xbf16>
    %cst_16 = arith.constant dense<0.000000e+00> : vector<8x256xf32>
    %20 = tpu.matmul %18, %19, %cst_16 {dimension_numbers = #tpu.dot_dimension_numbers<[1], [0], [0], [1], [0, 0, 1, 1], [], []>} : vector<8x32xbf16>, vector<32x256xbf16>, vector<8x256xf32> -> vector<8x256xf32>
    %c0_17 = arith.constant 0 : index
    %c0_18 = arith.constant 0 : index
    %21 = vector.load %arg8[%c0_17, %c0_18] : memref<1x256xf32, #tpu.memory_space<vmem>>, vector<1x256xf32>
    %22 = vector.broadcast %21 : vector<1x256xf32> to vector<8x256xf32>
    %23 = arith.addf %20, %22 : vector<8x256xf32>
    %24 = vector.extract_strided_slice %23 {offsets = [0, 0], sizes = [8, 128], strides = [1, 1]} : vector<8x256xf32> to vector<8x128xf32>
    %25 = vector.extract_strided_slice %23 {offsets = [0, 128], sizes = [8, 128], strides = [1, 1]} : vector<8x256xf32> to vector<8x128xf32>
    %cst_19 = arith.constant -2.000000e+01 : f32
    %cst_20 = arith.constant 2.000000e+00 : f32
    %26 = vector.broadcast %cst_19 : f32 to vector<8x128xf32>
    %27 = arith.maximumf %26, %25 : vector<8x128xf32>
    %28 = vector.broadcast %cst_20 : f32 to vector<8x128xf32>
    %29 = arith.minimumf %28, %27 : vector<8x128xf32>
    %30 = math.exp %29 : vector<8x128xf32>
    %31 = arith.mulf %1, %30 : vector<8x128xf32>
    %32 = arith.addf %24, %31 : vector<8x128xf32>
    %33 = math.tanh %32 : vector<8x128xf32>
    %cst_21 = arith.constant -2.000000e+00 : f32
    %34 = vector.broadcast %cst_21 : f32 to vector<8x128xf32>
    %35 = arith.mulf %34, %32 : vector<8x128xf32>
    %cst_22 = arith.constant 0.000000e+00 : f32
    %36 = vector.broadcast %cst_22 : f32 to vector<8x128xf32>
    %37 = arith.maximumf %35, %36 : vector<8x128xf32>
    %38 = math.absf %35 : vector<8x128xf32>
    %cst_23 = arith.constant 0.000000e+00 : f32
    %39 = vector.broadcast %cst_23 : f32 to vector<8x128xf32>
    %40 = arith.subf %39, %38 : vector<8x128xf32>
    %41 = math.exp %40 : vector<8x128xf32>
    %cst_24 = arith.constant 1.000000e+00 : f32
    %42 = vector.broadcast %cst_24 : f32 to vector<8x128xf32>
    %43 = arith.addf %42, %41 : vector<8x128xf32>
    %44 = math.log %43 : vector<8x128xf32>
    %45 = arith.addf %37, %44 : vector<8x128xf32>
    %cst_25 = arith.constant 2.000000e+00 : f32
    %46 = math.log %cst_25 : f32
    %47 = vector.broadcast %46 : f32 to vector<8x128xf32>
    %48 = arith.subf %47, %32 : vector<8x128xf32>
    %49 = arith.subf %48, %45 : vector<8x128xf32>
    %cst_26 = arith.constant 2.000000e+00 : f32
    %50 = vector.broadcast %cst_26 : f32 to vector<8x128xf32>
    %51 = arith.mulf %50, %49 : vector<8x128xf32>
    %cst_27 = arith.constant -13.8155107 : f32
    %52 = vector.broadcast %cst_27 : f32 to vector<8x128xf32>
    %53 = arith.maximumf %51, %52 : vector<8x128xf32>
    %cst_28 = arith.constant -5.000000e-01 : f32
    %54 = vector.broadcast %cst_28 : f32 to vector<8x128xf32>
    %55 = arith.mulf %54, %1 : vector<8x128xf32>
    %56 = arith.mulf %55, %1 : vector<8x128xf32>
    %57 = arith.subf %56, %29 : vector<8x128xf32>
    %58 = arith.subf %57, %53 : vector<8x128xf32>
    %cst_29 = arith.constant dense<0.000000e+00> : vector<8xf32>
    %59 = vector.multi_reduction <add>, %58, %cst_29 [1] : vector<8x128xf32> to vector<8xf32>
    %60 = vector.shape_cast %59 : vector<8xf32> to vector<8x1xf32>
    %cst_30 = arith.constant 6.28318548 : f32
    %61 = math.log %cst_30 : f32
    %cst_31 = arith.constant 5.000000e-01 : f32
    %62 = arith.mulf %cst_31, %61 : f32
    %cst_32 = arith.constant 4.000000e+00 : f32
    %63 = arith.mulf %62, %cst_32 : f32
    %64 = vector.broadcast %63 : f32 to vector<8x1xf32>
    %65 = arith.subf %60, %64 : vector<8x1xf32>
    %66 = tpu.iota {dimensions = array<i32: 1>} : vector<8x128xi32>
    %c4_i32 = arith.constant 4 : i32
    %67 = vector.broadcast %c4_i32 : i32 to vector<8x128xi32>
    %68 = arith.cmpi eq, %66, %67 : vector<8x128xi32>
    %cst_33 = arith.constant 1.000000e+00 : f32
    %69 = vector.broadcast %cst_33 : f32 to vector<8x128xf32>
    %70 = arith.mulf %69, %33 : vector<8x128xf32>
    %71 = vector.shape_cast %65 : vector<8x1xf32> to vector<8x1xf32>
    %72 = vector.broadcast %71 : vector<8x1xf32> to vector<8x128xf32>
    %73 = arith.select %68, %72, %70 : vector<8x128xi1>, vector<8x128xf32>
    %c0_34 = arith.constant 0 : index
    %c0_35 = arith.constant 0 : index
    %74 = vector.load %arg9[%c0_34, %c0_35] : memref<8x128xf32, #tpu.memory_space<vmem>>, vector<8x128xf32>
    tpu.vector_store %arg9[%c0_34, %c0_35], %73 {strides = array<i32>} : memref<8x128xf32, #tpu.memory_space<vmem>>, vector<8x128xf32>,
    return
  }
  func.func @transform_0(%arg0: i32) -> (i32, i32) {
    %c0_i32 = arith.constant 0 : i32
    %c0_i32_0 = arith.constant 0 : i32
    return %arg0, %c0_i32 : i32, i32
  }
  func.func @transform_1(%arg0: i32) -> (i32, i32) {
    %c0_i32 = arith.constant 0 : i32
    %c0_i32_0 = arith.constant 0 : i32
    return %arg0, %c0_i32 : i32, i32
  }
  func.func @transform_2(%arg0: i32) -> (i32, i32) {
    %c0_i32 = arith.constant 0 : i32
    %c0_i32_0 = arith.constant 0 : i32
    %c0_i32_1 = arith.constant 0 : i32
    return %c0_i32, %c0_i32_0 : i32, i32
  }
  func.func @transform_3(%arg0: i32) -> (i32, i32) {
    %c0_i32 = arith.constant 0 : i32
    %c0_i32_0 = arith.constant 0 : i32
    %c0_i32_1 = arith.constant 0 : i32
    return %c0_i32, %c0_i32_0 : i32, i32
  }
  func.func @transform_4(%arg0: i32) -> (i32, i32) {
    %c0_i32 = arith.constant 0 : i32
    %c0_i32_0 = arith.constant 0 : i32
    %c0_i32_1 = arith.constant 0 : i32
    return %c0_i32, %c0_i32_0 : i32, i32
  }
  func.func @transform_5(%arg0: i32) -> (i32, i32) {
    %c0_i32 = arith.constant 0 : i32
    %c0_i32_0 = arith.constant 0 : i32
    %c0_i32_1 = arith.constant 0 : i32
    return %c0_i32, %c0_i32_0 : i32, i32
  }
  func.func @transform_6(%arg0: i32) -> (i32, i32) {
    %c0_i32 = arith.constant 0 : i32
    %c0_i32_0 = arith.constant 0 : i32
    %c0_i32_1 = arith.constant 0 : i32
    return %c0_i32, %c0_i32_0 : i32, i32
  }
  func.func @transform_7(%arg0: i32) -> (i32, i32) {
    %c0_i32 = arith.constant 0 : i32
    %c0_i32_0 = arith.constant 0 : i32
    %c0_i32_1 = arith.constant 0 : i32
    return %c0_i32, %c0_i32_0 : i32, i32
  }
  func.func @transform_8(%arg0: i32) -> (i32, i32) {
    %c0_i32 = arith.constant 0 : i32
    %c0_i32_0 = arith.constant 0 : i32
    return %arg0, %c0_i32 : i32, i32
  }
}

</mosaic_0001>

<llo_original>
// kernel: tpu_custom_call.1
$region0: #{tpu_custom_call.1}
  #allocation0 [shape = 'u32[]', space=smem, size = 0x4, offset = 0x4, fixed_abs, tag = 'smem constant byte address 0x4 - core index']
  #allocation1 [shape = 'u32[144,128]{1,0:T(1,128)}', space=vmem, size = 0x12000, scoped, tag = 'internal scratch']
  %s0 = inlined_call_operand.hbm [shape: f32[8,16], index: 0, kind: input, shape index: {}]
  %s1 = inlined_call_operand.hbm [shape: f32[8,128], index: 1, kind: input, shape index: {}]
  %s2 = inlined_call_operand.hbm [shape: bf16[16,32], index: 2, kind: input, shape index: {}]
  %s3 = inlined_call_operand.vmem [shape: f32[1,32], index: 3, kind: input, shape index: {}]
  %s4 = inlined_call_operand.hbm [shape: bf16[32,32], index: 4, kind: input, shape index: {}]
  %s5 = inlined_call_operand.vmem [shape: f32[1,32], index: 5, kind: input, shape index: {}]
  %s6 = inlined_call_operand.hbm [shape: bf16[32,256], index: 6, kind: input, shape index: {}]
  %s7 = inlined_call_operand.vmem [shape: f32[1,256], index: 7, kind: input, shape index: {}]
  %s8 = inlined_call_operand.hbm [shape: f32[8,128], index: 8, kind: output, shape index: {}]
  %s9 = sld [smem:[#allocation0]]
  $region62: #{tpu_custom_call.1} parent=0
    _
  %s11 = ssub.s32 1, %s9
  %s12 = scalar_select 0, %s11, %s9
  $region1: #{tpu_custom_call.1} parent=0
    #allocation2 [shape = 'u8[4096]{0}', space=vmem, size = 0x1000, scoped, tag = 'input window, operand 0, single buffered']
    #allocation3 [shape = 's32[1]{0}', space=sflag, size = 0x4, scoped, tag = 'scoped memory for tpu_custom_call.1']
    #allocation4 [shape = 's32[1]{0}', space=sflag, size = 0x4, scoped, tag = 'scoped memory for tpu_custom_call.1']
    #allocation5 [shape = 'u8[4096]{0}', space=vmem, size = 0x1000, scoped, tag = 'input window, operand 1, single buffered']
    #allocation6 [shape = 's32[1]{0}', space=sflag, size = 0x4, scoped, tag = 'scoped memory for tpu_custom_call.1']
    #allocation7 [shape = 'u8[4096]{0}', space=vmem, size = 0x1000, scoped, tag = 'input window, operand 2, single buffered']
    #allocation8 [shape = 'u8[8192]{0}', space=vmem, size = 0x2000, scoped, tag = 'input window, operand 4, single buffered']
    #allocation9 [shape = 's32[1]{0}', space=sflag, size = 0x4, scoped, tag = 'scoped memory for tpu_custom_call.1']
    #allocation10 [shape = 'u8[16384]{0}', space=vmem, size = 0x4000, scoped, tag = 'input window, operand 6, single buffered']
    #allocation11 [shape = 'u8[4096]{0}', space=vmem, size = 0x1000, scoped, tag = 'output window, operand 0, single buffered']
    %13 = vsyncpa [#allocation3], 0
    %14 = vsyncpa [#allocation6], 0
    %15 = vsyncpa [#allocation9], 0
    %16 = vsyncpa [#allocation4], 0
    // Predicated region
    $region2: #{tpu_custom_call.1} parent=1 // pred_check
      _
    $region3: #{tpu_custom_call.1} parent=1 // pred_check_branch
      %18 = sbr.rel (0) target = $region5
    $region4: #{tpu_custom_call.1} parent=1 // pred_region
      %s20 = ssub.s32 128, 128
      %21 = vsyncadd [#allocation3], %s20
      %s23 = sshll.u32 [#allocation2], 4
      %s24 = int_to_ptr.vmem [resolvable:$true] %s23
      %26 = dma.hbm_to_vmem [thread:$0]  %s0, 128, %s24, [#allocation3]
    $region5: #{tpu_custom_call.1} parent=1 // pred_fallthru
      _
    // Predicated region
    $region6: #{tpu_custom_call.1} parent=1 // pred_check
      _
    $region7: #{tpu_custom_call.1} parent=1 // pred_check_branch
      %28 = sbr.rel (0) target = $region9
    $region8: #{tpu_custom_call.1} parent=1 // pred_region
      %s30 = ssub.s32 128, 128
      %31 = vsyncadd [#allocation6], %s30
      %s33 = sshll.u32 [#allocation5], 4
      %s34 = int_to_ptr.vmem [resolvable:$true] %s33
      %36 = dma.hbm_to_vmem [thread:$0]  %s1, 128, %s34, [#allocation6]
    $region9: #{tpu_custom_call.1} parent=1 // pred_fallthru
      _
    // Predicated region
    $region10: #{tpu_custom_call.1} parent=1 // pred_check
      _
    $region11: #{tpu_custom_call.1} parent=1 // pred_check_branch
      %38 = sbr.rel (0) target = $region13
    $region12: #{tpu_custom_call.1} parent=1 // pred_region
      %s40 = ssub.s32 128, 128
      %41 = vsyncadd [#allocation6], %s40
      %s42 = sshll.u32 [#allocation7], 4
      %s43 = int_to_ptr.vmem [resolvable:$true] %s42
      %48 = dma.hbm_to_vmem [thread:$0]  %s2, 128, %s43, [#allocation6], 64, 64, 4
    $region13: #{tpu_custom_call.1} parent=1 // pred_fallthru
      _
    // Predicated region
    $region14: #{tpu_custom_call.1} parent=1 // pred_check
      _
    $region15: #{tpu_custom_call.1} parent=1 // pred_check_branch
      %50 = sbr.rel (0) target = $region17
    $region16: #{tpu_custom_call.1} parent=1 // pred_region
      _
    $region17: #{tpu_custom_call.1} parent=1 // pred_fallthru
      _
    // Predicated region
    $region18: #{tpu_custom_call.1} parent=1 // pred_check
      _
    $region19: #{tpu_custom_call.1} parent=1 // pred_check_branch
      %52 = sbr.rel (0) target = $region21
    $region20: #{tpu_custom_call.1} parent=1 // pred_region
      %s54 = ssub.s32 256, 256
      %55 = vsyncadd [#allocation9], %s54
      %s56 = sshll.u32 [#allocation8], 4
      %s57 = int_to_ptr.vmem [resolvable:$true] %s56
      %62 = dma.hbm_to_vmem [thread:$0]  %s4, 256, %s57, [#allocation9], 64, 64, 4
    $region21: #{tpu_custom_call.1} parent=1 // pred_fallthru
      _
    // Predicated region
    $region22: #{tpu_custom_call.1} parent=1 // pred_check
      _
    $region23: #{tpu_custom_call.1} parent=1 // pred_check_branch
      %64 = sbr.rel (0) target = $region25
    $region24: #{tpu_custom_call.1} parent=1 // pred_region
      _
    $region25: #{tpu_custom_call.1} parent=1 // pred_fallthru
      _
    // Predicated region
    $region26: #{tpu_custom_call.1} parent=1 // pred_check
      _
    $region27: #{tpu_custom_call.1} parent=1 // pred_check_branch
      %66 = sbr.rel (0) target = $region29
    $region28: #{tpu_custom_call.1} parent=1 // pred_region
      %s68 = ssub.s32 512, 512
      %69 = vsyncadd [#allocation9], %s68
      %s70 = sshll.u32 [#allocation10], 4
      %s71 = int_to_ptr.vmem [resolvable:$true] %s70
      %76 = dma.hbm_to_vmem [thread:$0]  %s6, 512, %s71, [#allocation9], 128, 128, 8
    $region29: #{tpu_custom_call.1} parent=1 // pred_fallthru
      _
    // Predicated region
    $region30: #{tpu_custom_call.1} parent=1 // pred_check
      _
    $region31: #{tpu_custom_call.1} parent=1 // pred_check_branch
      %78 = sbr.rel (0) target = $region33
    $region32: #{tpu_custom_call.1} parent=1 // pred_region
      _
    $region33: #{tpu_custom_call.1} parent=1 // pred_fallthru
      _
    // Predicated region
    $region34: #{tpu_custom_call.1} parent=1 // pred_check
      _
    $region35: #{tpu_custom_call.1} parent=1 // pred_check_branch
      %80 = sbr.rel (0) target = $region37
    $region36: #{tpu_custom_call.1} parent=1 // pred_region
      %81 = dma.done [#allocation3], 128
    $region37: #{tpu_custom_call.1} parent=1 // pred_fallthru
      _
    // Predicated region
    $region38: #{tpu_custom_call.1} parent=1 // pred_check
      _
    $region39: #{tpu_custom_call.1} parent=1 // pred_check_branch
      %83 = sbr.rel (0) target = $region41
    $region40: #{tpu_custom_call.1} parent=1 // pred_region
      %84 = dma.done [#allocation6], 128
    $region41: #{tpu_custom_call.1} parent=1 // pred_fallthru
      _
    // Predicated region
    $region42: #{tpu_custom_call.1} parent=1 // pred_check
      _
    $region43: #{tpu_custom_call.1} parent=1 // pred_check_branch
      %86 = sbr.rel (0) target = $region45
    $region44: #{tpu_custom_call.1} parent=1 // pred_region
      %87 = dma.done [#allocation6], 128
    $region45: #{tpu_custom_call.1} parent=1 // pred_fallthru
      _
    // Predicated region
    $region46: #{tpu_custom_call.1} parent=1 // pred_check
      _
    $region47: #{tpu_custom_call.1} parent=1 // pred_check_branch
      %89 = sbr.rel (0) target = $region49
    $region48: #{tpu_custom_call.1} parent=1 // pred_region
      %90 = dma.done [#allocation9], 256
    $region49: #{tpu_custom_call.1} parent=1 // pred_fallthru
      _
    // Predicated region
    $region50: #{tpu_custom_call.1} parent=1 // pred_check
      _
    $region51: #{tpu_custom_call.1} parent=1 // pred_check_branch
      %92 = sbr.rel (0) target = $region53
    $region52: #{tpu_custom_call.1} parent=1 // pred_region
      %93 = dma.done [#allocation9], 512
    $region53: #{tpu_custom_call.1} parent=1 // pred_fallthru
      _
    %v95 = vld [vmem:[#allocation2] sm:$0xff]
    %v96 = vld [vmem:[#allocation5] sm:$0xff]
    %v97 = vpack.c.bf16 %v95, %v95
    %v98 = vld [vmem:[#allocation7] sm:$0xf]
    %v99 = vld [vmem:[#allocation7 + $0x4] sm:$0xf]
    %v100 = vld [vmem:[%s3] sm:$0x1]
    %v102 = vlaneseq
    %v103 = vshrl.u32 %v102, 7
    %v104 = vsub.s32 0, %v103
    %v105 = vrot.slane %v100, %v104
    %v109 = vunpack.c.l.b16 %v98
    %v110 = vunpack.c.l.b16 %v99
    %v111 = vpack.c.b16 %v110, %v109
    %vm113 = vcmask 130048
    %v115 = vsel %vm113, %v97, 0
    %117 = vmatprep.subr.bf16.mxu0 0
    %118 = vmatpush1.bf16.msra.mxu0 0
    %119 = vmatprep.subr.bf16.mxu0 0
    %120 = vmatpush1.bf16.msra.mxu0 0
    %121 = vmatprep.subr.bf16.mxu0 0
    %122 = vmatpush1.bf16.msra.mxu0 0
    %123 = vmatprep.subr.bf16.mxu0 0
    %124 = vmatpush1.bf16.msra.mxu0 0
    %125 = vmatprep.subr.bf16.mxu0 0
    %126 = vmatpush1.bf16.msra.mxu0 0
    %127 = vmatprep.subr.bf16.mxu0 0
    %128 = vmatpush1.bf16.msra.mxu0 0
    %129 = vmatprep.subr.bf16.mxu0 0
    %130 = vmatpush1.bf16.msra.mxu0 0
    %131 = vmatprep.subr.bf16.mxu0 0
    %132 = vmatpush1.bf16.msra.mxu0 %v111
    %133 = vmatprep.subr.bf16.mxu0 0
    %134 = vmatpush2.bf16.msra.mxu0 0
    %135 = vmatprep.subr.bf16.mxu0 0
    %136 = vmatpush2.bf16.msra.mxu0 0
    %137 = vmatprep.subr.bf16.mxu0 0
    %138 = vmatpush2.bf16.msra.mxu0 0
    %139 = vmatprep.subr.bf16.mxu0 0
    %140 = vmatpush2.bf16.msra.mxu0 0
    %141 = vmatprep.subr.bf16.mxu0 0
    %142 = vmatpush2.bf16.msra.mxu0 0
    %143 = vmatprep.subr.bf16.mxu0 0
    %144 = vmatpush2.bf16.msra.mxu0 0
    %145 = vmatprep.subr.bf16.mxu0 0
    %146 = vmatpush2.bf16.msra.mxu0 0
    %147 = vmatprep.subr.bf16.mxu0 0
    %148 = vmatpush2.bf16.msra.mxu0 0
    %149 = vmatprep.mubr.bf16.mxu0 0
    %150 = vmatmul.mubr.bf16.gmra.mxu0 %v115
    %v151 = vpop.f32.mrf.mxu0
    %v152 = vadd.f32 %v105, %v151
    %v153 = vpop.f32.mrf.mxu0
    %v154 = vpop.f32.mrf.mxu0
    %v155 = vpop.f32.mrf.mxu0
    %156 = vdwg.mxu0
    %v157 = vmax.f32 %v152, 0.0
    %v158 = vpack.c.bf16 %v157, %v157
    %v159 = vld [vmem:[#allocation8] sm:$0xf]
    %v160 = vld [vmem:[#allocation8 + $0x4] sm:$0xf]
    %v161 = vld [vmem:[#allocation8 + $0x8] sm:$0xf]
    %v162 = vld [vmem:[#allocation8 + $0xc] sm:$0xf]
    %v163 = vld [vmem:[%s5] sm:$0x1]
    %v165 = vlaneseq
    %v166 = vshrl.u32 %v165, 7
    %v167 = vsub.s32 0, %v166
    %v168 = vrot.slane %v163, %v167
    %v174 = vunpack.c.l.b16 %v159
    %v175 = vunpack.c.l.b16 %v160
    %v176 = vunpack.c.l.b16 %v161
    %v177 = vunpack.c.l.b16 %v162
    %v178 = vpack.c.b16 %v175, %v174
    %v179 = vpack.c.b16 %v177, %v176
    %vm182 = vcmask 261120
    %v184 = vsel %vm182, %v158, 0
    %186 = vmatprep.subr.bf16.mxu0 0
    %187 = vmatpush1.bf16.msra.mxu0 0
    %188 = vmatprep.subr.bf16.mxu0 0
    %189 = vmatpush1.bf16.msra.mxu0 0
    %190 = vmatprep.subr.bf16.mxu0 0
    %191 = vmatpush1.bf16.msra.mxu0 0
    %192 = vmatprep.subr.bf16.mxu0 0
    %193 = vmatpush1.bf16.msra.mxu0 0
    %194 = vmatprep.subr.bf16.mxu0 0
    %195 = vmatpush1.bf16.msra.mxu0 0
    %196 = vmatprep.subr.bf16.mxu0 0
    %197 = vmatpush1.bf16.msra.mxu0 0
    %198 = vmatprep.subr.bf16.mxu0 0
    %199 = vmatpush1.bf16.msra.mxu0 %v179
    %200 = vmatprep.subr.bf16.mxu0 0
    %201 = vmatpush1.bf16.msra.mxu0 %v178
    %202 = vmatprep.subr.bf16.mxu0 0
    %203 = vmatpush2.bf16.msra.mxu0 0
    %204 = vmatprep.subr.bf16.mxu0 0
    %205 = vmatpush2.bf16.msra.mxu0 0
    %206 = vmatprep.subr.bf16.mxu0 0
    %207 = vmatpush2.bf16.msra.mxu0 0
    %208 = vmatprep.subr.bf16.mxu0 0
    %209 = vmatpush2.bf16.msra.mxu0 0
    %210 = vmatprep.subr.bf16.mxu0 0
    %211 = vmatpush2.bf16.msra.mxu0 0
    %212 = vmatprep.subr.bf16.mxu0 0
    %213 = vmatpush2.bf16.msra.mxu0 0
    %214 = vmatprep.subr.bf16.mxu0 0
    %215 = vmatpush2.bf16.msra.mxu0 0
    %216 = vmatprep.subr.bf16.mxu0 0
    %217 = vmatpush2.bf16.msra.mxu0 0
    %218 = vmatprep.mubr.bf16.mxu0 0
    %219 = vmatmul.mubr.bf16.gmra.mxu0 %v184
    %v220 = vpop.f32.mrf.mxu0
    %v221 = vadd.f32 %v168, %v220
    %v222 = vpop.f32.mrf.mxu0
    %v223 = vpop.f32.mrf.mxu0
    %v224 = vpop.f32.mrf.mxu0
    %225 = vdwg.mxu0
    %v226 = vmax.f32 %v221, 0.0
    %v227 = vpack.c.bf16 %v226, %v226
    %v228 = vld [vmem:[#allocation10] sm:$0xff]
    %v229 = vld [vmem:[#allocation10 + $0x8] sm:$0xff]
    %v230 = vld [vmem:[#allocation10 + $0x10] sm:$0xff]
    %v231 = vld [vmem:[#allocation10 + $0x18] sm:$0xff]
    %v232 = vld [vmem:[%s7] sm:$0x3]
    %v234 = vlaneseq
    %v235 = vshrl.u32 %v234, 7
    %v236 = vsub.s32 0, %v235
    %v237 = vrot.slane %v232, %v236
    %v238 = vlaneseq
    %v239 = vshrl.u32 %v238, 7
    %v240 = vsub.s32 1, %v239
    %v241 = vrot.slane %v232, %v240
    %v248 = vunpack.c.l.b16 %v228
    %v249 = vunpack.c.h.b16 %v228
    %v250 = vunpack.c.l.b16 %v229
    %v251 = vunpack.c.h.b16 %v229
    %v252 = vunpack.c.l.b16 %v230
    %v253 = vunpack.c.h.b16 %v230
    %v254 = vunpack.c.l.b16 %v231
    %v255 = vunpack.c.h.b16 %v231
    %v256 = vpack.c.b16 %v250, %v248
    %v257 = vpack.c.b16 %v251, %v249
    %v258 = vpack.c.b16 %v254, %v252
    %v259 = vpack.c.b16 %v255, %v253
    %v265 = vsel %vm182, %v227, 0
    %267 = vmatprep.subr.bf16.mxu0 0
    %268 = vmatpush1.bf16.msra.mxu0 0
    %269 = vmatprep.subr.bf16.mxu0 0
    %270 = vmatpush1.bf16.msra.mxu0 0
    %271 = vmatprep.subr.bf16.mxu0 0
    %272 = vmatpush1.bf16.msra.mxu0 0
    %273 = vmatprep.subr.bf16.mxu0 0
    %274 = vmatpush1.bf16.msra.mxu0 0
    %275 = vmatprep.subr.bf16.mxu0 0
    %276 = vmatpush1.bf16.msra.mxu0 0
    %277 = vmatprep.subr.bf16.mxu0 0
    %278 = vmatpush1.bf16.msra.mxu0 0
    %279 = vmatprep.subr.bf16.mxu0 %v259
    %280 = vmatpush1.bf16.msra.mxu0 %v258
    %281 = vmatprep.subr.bf16.mxu0 %v257
    %282 = vmatpush1.bf16.msra.mxu0 %v256
    %283 = vmatprep.subr.bf16.mxu0 0
    %284 = vmatpush2.bf16.msra.mxu0 0
    %285 = vmatprep.subr.bf16.mxu0 0
    %286 = vmatpush2.bf16.msra.mxu0 0
    %287 = vmatprep.subr.bf16.mxu0 0
    %288 = vmatpush2.bf16.msra.mxu0 0
    %289 = vmatprep.subr.bf16.mxu0 0
    %290 = vmatpush2.bf16.msra.mxu0 0
    %291 = vmatprep.subr.bf16.mxu0 0
    %292 = vmatpush2.bf16.msra.mxu0 0
    %293 = vmatprep.subr.bf16.mxu0 0
    %294 = vmatpush2.bf16.msra.mxu0 0
    %295 = vmatprep.subr.bf16.mxu0 0
    %296 = vmatpush2.bf16.msra.mxu0 0
    %297 = vmatprep.subr.bf16.mxu0 0
    %298 = vmatpush2.bf16.msra.mxu0 0
    %299 = vmatprep.mubr.bf16.mxu0 0
    %300 = vmatmul.mubr.bf16.gmra.mxu0 %v265
    %v301 = vpop.f32.mrf.mxu0
    %v302 = vadd.f32 %v237, %v301
    %v303 = vpop.f32.mrf.mxu0
    %v304 = vadd.f32 %v241, %v303
    %v305 = vpop.f32.mrf.mxu0
    %v306 = vpop.f32.mrf.mxu0
    %307 = vdwg.mxu0
    %v308 = vmax.f32 %v304, -20.0
    %v309 = vmin.f32 %v308, 2.0
    %v310 = vmul.f32 %v309, 1.442695
    %v311 = vpow.pop %v310
    %v312 = vmul.f32 %v96, %v311
    %v313 = vadd.f32 %v302, %v312
    %v314 = vtanh.pop %v313
    %v315 = vmul.f32 %v313, -2.0
    %v316 = vmax.f32 %v315, 0.0
    %v317 = vand.u32 2147483647, %v315
    %v318 = vsub.f32 0.0, %v317
    %v319 = vmul.f32 %v318, 1.442695
    %v320 = vpow.pop %v319
    %v321 = vadd.f32 %v320, 1.0
    %v322 = vlog2.pop %v321
    %v323 = vmul.f32 %v322, 0.6931472
    %v324 = vadd.f32 %v316, %v323
    %v325 = vsub.f32 0.6931472, %v313
    %v326 = vsub.f32 %v325, %v324
    %v327 = vmul.f32 %v326, 2.0
    %v328 = vmax.f32 %v327, -13.815511
    %v329 = vmul.f32 %v96, -0.5
    %v330 = vmul.f32 %v329, %v96
    %v331 = vsub.f32 %v330, %v309
    %v332 = vsub.f32 %v331, %v328
    %333 = vadd.xlane.f32.xlu0 %v332
    %v334 = vpop.xlane.xlu0 %333
    %v335 = vsub.f32 %v334, 3.675754
    %v336 = vlaneseq
    %v337 = vand.u32 %v336, 127
    %vm338 = vcmp.eq.s32.totalorder %v337, 4
    %v339 = vsel %vm338, %v335, %v314
    %340 = vst [vmem:[#allocation11] sm:$0xff] %v339
    // Predicated region
    $region54: #{tpu_custom_call.1} parent=1 // pred_check
      _
    $region55: #{tpu_custom_call.1} parent=1 // pred_check_branch
      %342 = sbr.rel (0) target = $region57
    $region56: #{tpu_custom_call.1} parent=1 // pred_region
      %s344 = ssub.s32 128, 128
      %345 = vsyncadd [#allocation4], %s344
      %s347 = sshll.u32 [#allocation11], 4
      %s348 = int_to_ptr.vmem [resolvable:$true] %s347
      %350 = dma.vmem_to_hbm [thread:$0]  %s348, 128, %s8, [#allocation4]
    $region57: #{tpu_custom_call.1} parent=1 // pred_fallthru
      _
    // Predicated region
    $region58: #{tpu_custom_call.1} parent=1 // pred_check
      _
    $region59: #{tpu_custom_call.1} parent=1 // pred_check_branch
      %352 = sbr.rel (0) target = $region61
    $region60: #{tpu_custom_call.1} parent=1 // pred_region
      %353 = dma.done [#allocation4], 128
    $region61: #{tpu_custom_call.1} parent=1 // pred_fallthru
      _
    %354 = vsyncpa [#allocation3], 1
    %355 = vsyncpa [#allocation6], 1
    %356 = vsyncpa [#allocation9], 1
    %357 = vsyncpa [#allocation4], 1

</llo_original>
